<compile_context>
chip_gen: v6e
topology: v6e:2x2x1
jax: 0.10.0
libtpu: 0.0.40
codegen_flags: <defaults>
</compile_context>

<pallas_src>
import jax
import jax.numpy as jnp
from jax.experimental import pallas as pl
from jax.experimental.pallas import tpu as pltpu


def _round_up(n, m):
    return ((n + m - 1) // m) * m


def _nbytes(shape, dtype):
    n = 1
    for s in shape:
        n *= int(s)
    return n * jnp.dtype(dtype).itemsize


def _pick_time_chunk(T, max_unroll=16):
    """Timesteps handled per grid step (static unroll inside the kernel).

    Capped at 16: per-grid-step overhead (~0.35us) is already small relative
    to chunk compute there, and deeper unrolls only buy spills."""
    if T <= max_unroll:
        return T
    for tc in range(max_unroll, 7, -1):          # prefer sublane-aligned chunks
        if T % tc == 0 and tc % 8 == 0:
            return tc
    for tc in range(max_unroll, 0, -1):
        if T % tc == 0:
            return tc
    return 1


def _vmem_limit_bytes(blk_bytes):
    """Request enough scoped VMEM for our buffers, capped at ~75% of the
    chip's physical VMEM (128 MiB on v5e/v6e, 64 MiB/TC on v7x)."""
    try:
        cap = int(pltpu.get_tpu_info().vmem_capacity_bytes)
    except Exception:
        cap = 64 << 20                            # conservative fallback (v7x)
    cap = (cap * 3) // 4                          # compiler headroom
    return int(min(cap, max(32 << 20, blk_bytes)))


def rnn_kernel(x_ref, wih_ref, whh_ref, b_ref, wfc_ref, bfc_ref,
               out_ref, h_scratch):
    """One (batch_block, time_chunk) grid step of the tanh-RNN + fc head.

    x_ref     : (Tc*Bb, Dp)  time-major chunk slab (compute dtype)
    wih_ref   : (Dp, Hp)     W_ih^T  (resident)
    whh_ref   : (Hp, Hp)     W_hh^T  (resident)
    b_ref     : (1, Hp)      b_ih + b_hh (f32)
    wfc_ref   : (Hp, Cp)     W_fc^T  (resident)
    bfc_ref   : (1, Cp)      b_fc (f32)
    out_ref   : (Bb, Cp)     logits (written on the last time chunk only)
    h_scratch : (Bb, Hp)     hidden state carried across time chunks (f32)
    """
    c = pl.program_id(1)                          # time-chunk index (innermost)

    @pl.when(c == 0)
    def _():
        h_scratch[...] = jnp.zeros_like(h_scratch)

    bb = h_scratch.shape[0]
    tc = x_ref.shape[0] // bb

    # Hoisted input projection: one big MXU matmul per chunk, bias folded in.
    z = jnp.dot(x_ref[...], wih_ref[...],
                preferred_element_type=jnp.float32) + b_ref[...]   # (Tc*Bb, Hp)

    whh = whh_ref[...]
    h = h_scratch[...]                            # (Bb, Hp) f32
    for tt in range(tc):                          # bounded (<=16) static unroll
        z_t = z[tt * bb:(tt + 1) * bb, :]         # static contiguous row slab
        h = jnp.tanh(z_t + jnp.dot(h.astype(whh.dtype), whh,
                                   preferred_element_type=jnp.float32))

    h_scratch[...] = h                            # carry across time chunks

    @pl.when(c == pl.num_programs(1) - 1)
    def _():
        out_ref[...] = (
            jnp.dot(h.astype(wfc_ref.dtype), wfc_ref[...],
                    preferred_element_type=jnp.float32)
            + bfc_ref[...]
        ).astype(out_ref.dtype)


def rnn_forward(x, w_ih, w_hh, b_ih, b_hh, w_fc, b_fc, *,
                compute_dtype=None, time_chunk=None, batch_blocks=None,
                core_parallel_batch=False):
    """x: (B, T, D) float32.  Returns (B, num_classes) float32.

    compute_dtype      : dtype of MXU operands (x and weight matrices).
                         None -> bfloat16 (fast MXU path); hidden state, bias,
                         tanh and accumulation stay f32 regardless.
    batch_blocks       : batch tiles.  Default 1 (single-TC v5e/v6e: splitting
                         only shrinks MXU row fill).  On v7x pass 2 when
                         B//2 >= 128 and set core_parallel_batch=True.
    """
    B, T, D = x.shape
    H = w_ih.shape[0]
    C = w_fc.shape[0]

    cdt = jnp.bfloat16 if compute_dtype is None else compute_dtype

    Hp = _round_up(H, 128)                        # lane-dense hidden dim
    Cp = _round_up(C, 128)                        # lane-dense output dim
    Dp = _round_up(D, 128)                        # lane-dense input dim

    Tc = time_chunk if time_chunk is not None else _pick_time_chunk(T)
    assert T % Tc == 0, "time_chunk must divide T"
    n_chunks = T // Tc

    nb = 1 if batch_blocks is None else batch_blocks
    assert B % nb == 0
    Bb = B // nb
    assert Bb == B or Bb % 8 == 0, "per-block batch must stay sublane aligned"

    # Weights pre-transposed, zero-padded, cast to the MXU compute dtype.
    wih_p = jnp.pad(w_ih.T.astype(cdt), ((0, Dp - D), (0, Hp - H)))     # (Dp, Hp)
    whh_p = jnp.pad(w_hh.T.astype(cdt), ((0, Hp - H), (0, Hp - H)))     # (Hp, Hp)
    wfc_p = jnp.pad(w_fc.T.astype(cdt), ((0, Hp - H), (0, Cp - C)))     # (Hp, Cp)
    # Biases pre-added and kept f32 (elementwise math stays f32 on all chips).
    b_p = jnp.pad((b_ih + b_hh).astype(jnp.float32), (0, Hp - H)).reshape(1, Hp)
    bfc_p = jnp.pad(b_fc.astype(jnp.float32), (0, Cp - C)).reshape(1, Cp)

    # Time-major chunk slabs: each grid step reads one contiguous, lane-dense
    # (Tc*Bb, Dp) block (rows ordered time-major within the chunk).
    x_c = x.astype(cdt)
    x_blk = x_c.reshape(nb, Bb, n_chunks, Tc, D)
    x_blk = jnp.transpose(x_blk, (2, 0, 3, 1, 4))          # (nc, nb, Tc, Bb, D)
    x_blk = x_blk.reshape(n_chunks, nb, Tc * Bb, D)
    x_blk = jnp.pad(x_blk, ((0, 0), (0, 0), (0, 0), (0, Dp - D)))

    # Explicit VMEM budget from actual buffer sizes (incl. hoisted Z temp).
    blk_bytes = (
        2 * _nbytes((Tc * Bb, Dp), cdt)                         # x (dbl-buffered)
        + 2 * (_nbytes((Dp, Hp), cdt) + _nbytes((Hp, Hp), cdt)
               + _nbytes((Hp, Cp), cdt))                        # resident weights
        + 2 * (_nbytes((1, Hp), jnp.float32) + _nbytes((1, Cp), jnp.float32))
        + 2 * _nbytes((Bb, Cp), jnp.float32)                    # output
        + _nbytes((Bb, Hp), jnp.float32)                        # h scratch
        + 2 * _nbytes((Tc * Bb, Hp), jnp.float32)               # Z + slack
    )
    vmem_limit = _vmem_limit_bytes(blk_bytes)

    if nb > 1 and core_parallel_batch:
        batch_sem = pltpu.CORE_PARALLEL           # shard batch across v7x TCs
    elif nb > 1:
        batch_sem = "parallel"
    else:
        batch_sem = "arbitrary"

    grid_spec = pltpu.PrefetchScalarGridSpec(
        num_scalar_prefetch=0,
        grid=(nb, n_chunks),
        in_specs=[
            # x chunk slab for (batch block b, time chunk c); leading dims squeezed.
            pl.BlockSpec((None, None, Tc * Bb, Dp), lambda b, c: (c, b, 0, 0)),
            # Resident parameters (constant index maps; fetched once).
            pl.BlockSpec((Dp, Hp), lambda b, c: (0, 0)),        # W_ih^T
            pl.BlockSpec((Hp, Hp), lambda b, c: (0, 0)),        # W_hh^T
            pl.BlockSpec((1, Hp), lambda b, c: (0, 0)),         # b_ih + b_hh
            pl.BlockSpec((Hp, Cp), lambda b, c: (0, 0)),        # W_fc^T
            pl.BlockSpec((1, Cp), lambda b, c: (0, 0)),         # b_fc
        ],
        out_specs=pl.BlockSpec((Bb, Cp), lambda b, c: (b, 0)),
        scratch_shapes=[pltpu.VMEM((Bb, Hp), jnp.float32)],     # hidden state
    )

    out_p = pl.pallas_call(
        rnn_kernel,
        out_shape=jax.ShapeDtypeStruct((B, Cp), jnp.float32),
        grid_spec=grid_spec,
        compiler_params=pltpu.CompilerParams(
            dimension_semantics=(batch_sem, "arbitrary"),
            vmem_limit_bytes=vmem_limit),
    )(x_blk, wih_p, whh_p, b_p, wfc_p, bfc_p)

    return out_p[:, :C]


def rnn_forward_ref(x, w_ih, w_hh, b_ih, b_hh, w_fc, b_fc):
    """Pure-JAX reference mirroring torch.nn.RNN (tanh) + Linear."""
    B, T, D = x.shape
    H = w_ih.shape[0]
    h = jnp.zeros((B, H), jnp.float32)

    def step(h, x_t):
        h = jnp.tanh(x_t @ w_ih.T + b_ih + h @ w_hh.T + b_hh)
        return h, None

    h, _ = jax.lax.scan(step, h, jnp.transpose(x, (1, 0, 2)))
    return h @ w_fc.T + b_fc


if __name__ == "__main__":
    # small shapes: batch=2, seq=8, input_dim=16, hidden=32, classes=4
    B, T, D, H, C = 2, 8, 16, 32, 4

    key = jax.random.PRNGKey(0)
    kx, k1, k2, k3, k4, k5, k6 = jax.random.split(key, 7)

    x = jax.random.normal(kx, (B, T, D), jnp.float32)
    # deterministic parameter init (roughly PyTorch's 1/sqrt(H) scale)
    s = 1.0 / jnp.sqrt(jnp.float32(H))
    w_ih = jax.random.uniform(k1, (H, D), jnp.float32, -s, s)
    w_hh = jax.random.uniform(k2, (H, H), jnp.float32, -s, s)
    b_ih = jax.random.uniform(k3, (H,), jnp.float32, -s, s)
    b_hh = jax.random.uniform(k4, (H,), jnp.float32, -s, s)
    w_fc = jax.random.uniform(k5, (C, H), jnp.float32, -s, s)
    b_fc = jax.random.uniform(k6, (C,), jnp.float32, -s, s)

    ref = rnn_forward_ref(x, w_ih, w_hh, b_ih, b_hh, w_fc, b_fc)

    # f32 MXU-operand path: must match the f32 reference tightly.
    out = jax.block_until_ready(
        rnn_forward(x, w_ih, w_hh, b_ih, b_hh, w_fc, b_fc,
                    compute_dtype=jnp.float32))
    assert out.shape == (B, C)
    assert jnp.allclose(out, ref, atol=1e-5, rtol=1e-5), (out, ref)

    # default path (bf16 MXU operands, f32 hidden/tanh): relaxed tolerance.
    out_bf16 = jax.block_until_ready(
        rnn_forward(x, w_ih, w_hh, b_ih, b_hh, w_fc, b_fc))
    assert out_bf16.shape == (B, C)
    assert jnp.allclose(out_bf16, ref, atol=5e-2, rtol=5e-2), (out_bf16, ref)

    print("KERNEL_OK")
</pallas_src>

<mosaic_0001>
module attributes {stable_mosaic.version = 11 : i64} {
  func.func @rnn_kernel(%arg0: i32, %arg1: i32, %arg2: memref<1x1x16x128xf32, #tpu.memory_space<vmem>>, %arg3: memref<128x128xf32, #tpu.memory_space<vmem>>, %arg4: memref<128x128xf32, #tpu.memory_space<vmem>>, %arg5: memref<1x128xf32, #tpu.memory_space<vmem>>, %arg6: memref<128x128xf32, #tpu.memory_space<vmem>>, %arg7: memref<1x128xf32, #tpu.memory_space<vmem>>, %arg8: memref<2x128xf32, #tpu.memory_space<vmem>>, %arg9: memref<2x128xf32, #tpu.memory_space<vmem>>) attributes {dimension_semantics = [#tpu.dimension_semantics<arbitrary>, #tpu.dimension_semantics<arbitrary>], iteration_bounds = array<i64: 1, 1>, scalar_prefetch = 0 : i64, scratch_operands = 1 : i64, tpu.core_type = #tpu.core_type<tc>, window_params = [{transform_indices = @transform_0, window_bounds = array<i64: 1, 1, 16, 128>}, {pipeline_mode = #tpu.pipeline_mode<synchronous>, transform_indices = @transform_1, window_bounds = array<i64: 128, 128>}, {pipeline_mode = #tpu.pipeline_mode<synchronous>, transform_indices = @transform_2, window_bounds = array<i64: 128, 128>}, {pipeline_mode = #tpu.pipeline_mode<synchronous>, transform_indices = @transform_3, window_bounds = array<i64: 1, 128>}, {pipeline_mode = #tpu.pipeline_mode<synchronous>, transform_indices = @transform_4, window_bounds = array<i64: 128, 128>}, {pipeline_mode = #tpu.pipeline_mode<synchronous>, transform_indices = @transform_5, window_bounds = array<i64: 1, 128>}, {transform_indices = @transform_6, window_bounds = array<i64: 2, 128>}]} {
    %c0_i32 = arith.constant 0 : i32
    %0 = arith.cmpi eq, %arg1, %c0_i32 : i32
    %1 = arith.extui %0 : i1 to i32
    %c0_i32_0 = arith.constant 0 : i32
    %2 = arith.cmpi ne, %1, %c0_i32_0 : i32
    scf.if %2 {
      %cst_24 = arith.constant 0.000000e+00 : f32
      %48 = vector.broadcast %cst_24 : f32 to vector<2x128xf32>
      %c0_25 = arith.constant 0 : index
      %c0_26 = arith.constant 0 : index
      %49 = vector.load %arg9[%c0_25, %c0_26] : memref<2x128xf32, #tpu.memory_space<vmem>>, vector<2x128xf32>
      tpu.vector_store %arg9[%c0_25, %c0_26], %48 {strides = array<i32>} : memref<2x128xf32, #tpu.memory_space<vmem>>, vector<2x128xf32>,
    } else {
    }
    %c0 = arith.constant 0 : index
    %c0_1 = arith.constant 0 : index
    %c0_2 = arith.constant 0 : index
    %c0_3 = arith.constant 0 : index
    %3 = vector.load %arg2[%c0, %c0_1, %c0_2, %c0_3] : memref<1x1x16x128xf32, #tpu.memory_space<vmem>>, vector<1x1x16x128xf32>
    %4 = vector.shape_cast %3 : vector<1x1x16x128xf32> to vector<16x128xf32>
    %c0_4 = arith.constant 0 : index
    %c0_5 = arith.constant 0 : index
    %5 = vector.load %arg3[%c0_4, %c0_5] : memref<128x128xf32, #tpu.memory_space<vmem>>, vector<128x128xf32>
    %cst = arith.constant dense<0.000000e+00> : vector<16x128xf32>
    %6 = tpu.matmul %4, %5, %cst {dimension_numbers = #tpu.dot_dimension_numbers<[1], [0], [0], [1], [0, 0, 1, 1], [], []>} : vector<16x128xf32>, vector<128x128xf32>, vector<16x128xf32> -> vector<16x128xf32>
    %c0_6 = arith.constant 0 : index
    %c0_7 = arith.constant 0 : index
    %7 = vector.load %arg5[%c0_6, %c0_7] : memref<1x128xf32, #tpu.memory_space<vmem>>, vector<1x128xf32>
    %8 = vector.broadcast %7 : vector<1x128xf32> to vector<16x128xf32>
    %9 = arith.addf %6, %8 : vector<16x128xf32>
    %c0_8 = arith.constant 0 : index
    %c0_9 = arith.constant 0 : index
    %10 = vector.load %arg4[%c0_8, %c0_9] : memref<128x128xf32, #tpu.memory_space<vmem>>, vector<128x128xf32>
    %c0_10 = arith.constant 0 : index
    %c0_11 = arith.constant 0 : index
    %11 = vector.load %arg9[%c0_10, %c0_11] : memref<2x128xf32, #tpu.memory_space<vmem>>, vector<2x128xf32>
    %12 = vector.extract_strided_slice %9 {offsets = [0, 0], sizes = [2, 128], strides = [1, 1]} : vector<16x128xf32> to vector<2x128xf32>
    %cst_12 = arith.constant dense<0.000000e+00> : vector<2x128xf32>
    %13 = tpu.matmul %11, %10, %cst_12 {dimension_numbers = #tpu.dot_dimension_numbers<[1], [0], [0], [1], [0, 0, 1, 1], [], []>} : vector<2x128xf32>, vector<128x128xf32>, vector<2x128xf32> -> vector<2x128xf32>
    %14 = arith.addf %12, %13 : vector<2x128xf32>
    %15 = math.tanh %14 : vector<2x128xf32>
    %16 = vector.extract_strided_slice %9 {offsets = [2, 0], sizes = [2, 128], strides = [1, 1]} : vector<16x128xf32> to vector<2x128xf32>
    %cst_13 = arith.constant dense<0.000000e+00> : vector<2x128xf32>
    %17 = tpu.matmul %15, %10, %cst_13 {dimension_numbers = #tpu.dot_dimension_numbers<[1], [0], [0], [1], [0, 0, 1, 1], [], []>} : vector<2x128xf32>, vector<128x128xf32>, vector<2x128xf32> -> vector<2x128xf32>
    %18 = arith.addf %16, %17 : vector<2x128xf32>
    %19 = math.tanh %18 : vector<2x128xf32>
    %20 = vector.extract_strided_slice %9 {offsets = [4, 0], sizes = [2, 128], strides = [1, 1]} : vector<16x128xf32> to vector<2x128xf32>
    %cst_14 = arith.constant dense<0.000000e+00> : vector<2x128xf32>
    %21 = tpu.matmul %19, %10, %cst_14 {dimension_numbers = #tpu.dot_dimension_numbers<[1], [0], [0], [1], [0, 0, 1, 1], [], []>} : vector<2x128xf32>, vector<128x128xf32>, vector<2x128xf32> -> vector<2x128xf32>
    %22 = arith.addf %20, %21 : vector<2x128xf32>
    %23 = math.tanh %22 : vector<2x128xf32>
    %24 = vector.extract_strided_slice %9 {offsets = [6, 0], sizes = [2, 128], strides = [1, 1]} : vector<16x128xf32> to vector<2x128xf32>
    %cst_15 = arith.constant dense<0.000000e+00> : vector<2x128xf32>
    %25 = tpu.matmul %23, %10, %cst_15 {dimension_numbers = #tpu.dot_dimension_numbers<[1], [0], [0], [1], [0, 0, 1, 1], [], []>} : vector<2x128xf32>, vector<128x128xf32>, vector<2x128xf32> -> vector<2x128xf32>
    %26 = arith.addf %24, %25 : vector<2x128xf32>
    %27 = math.tanh %26 : vector<2x128xf32>
    %28 = vector.extract_strided_slice %9 {offsets = [8, 0], sizes = [2, 128], strides = [1, 1]} : vector<16x128xf32> to vector<2x128xf32>
    %cst_16 = arith.constant dense<0.000000e+00> : vector<2x128xf32>
    %29 = tpu.matmul %27, %10, %cst_16 {dimension_numbers = #tpu.dot_dimension_numbers<[1], [0], [0], [1], [0, 0, 1, 1], [], []>} : vector<2x128xf32>, vector<128x128xf32>, vector<2x128xf32> -> vector<2x128xf32>
    %30 = arith.addf %28, %29 : vector<2x128xf32>
    %31 = math.tanh %30 : vector<2x128xf32>
    %32 = vector.extract_strided_slice %9 {offsets = [10, 0], sizes = [2, 128], strides = [1, 1]} : vector<16x128xf32> to vector<2x128xf32>
    %cst_17 = arith.constant dense<0.000000e+00> : vector<2x128xf32>
    %33 = tpu.matmul %31, %10, %cst_17 {dimension_numbers = #tpu.dot_dimension_numbers<[1], [0], [0], [1], [0, 0, 1, 1], [], []>} : vector<2x128xf32>, vector<128x128xf32>, vector<2x128xf32> -> vector<2x128xf32>
    %34 = arith.addf %32, %33 : vector<2x128xf32>
    %35 = math.tanh %34 : vector<2x128xf32>
    %36 = vector.extract_strided_slice %9 {offsets = [12, 0], sizes = [2, 128], strides = [1, 1]} : vector<16x128xf32> to vector<2x128xf32>
    %cst_18 = arith.constant dense<0.000000e+00> : vector<2x128xf32>
    %37 = tpu.matmul %35, %10, %cst_18 {dimension_numbers = #tpu.dot_dimension_numbers<[1], [0], [0], [1], [0, 0, 1, 1], [], []>} : vector<2x128xf32>, vector<128x128xf32>, vector<2x128xf32> -> vector<2x128xf32>
    %38 = arith.addf %36, %37 : vector<2x128xf32>
    %39 = math.tanh %38 : vector<2x128xf32>
    %40 = vector.extract_strided_slice %9 {offsets = [14, 0], sizes = [2, 128], strides = [1, 1]} : vector<16x128xf32> to vector<2x128xf32>
    %cst_19 = arith.constant dense<0.000000e+00> : vector<2x128xf32>
    %41 = tpu.matmul %39, %10, %cst_19 {dimension_numbers = #tpu.dot_dimension_numbers<[1], [0], [0], [1], [0, 0, 1, 1], [], []>} : vector<2x128xf32>, vector<128x128xf32>, vector<2x128xf32> -> vector<2x128xf32>
    %42 = arith.addf %40, %41 : vector<2x128xf32>
    %43 = math.tanh %42 : vector<2x128xf32>
    %c0_20 = arith.constant 0 : index
    %c0_21 = arith.constant 0 : index
    %44 = vector.load %arg9[%c0_20, %c0_21] : memref<2x128xf32, #tpu.memory_space<vmem>>, vector<2x128xf32>
    tpu.vector_store %arg9[%c0_20, %c0_21], %43 {strides = array<i32>} : memref<2x128xf32, #tpu.memory_space<vmem>>, vector<2x128xf32>,
    %c0_i32_22 = arith.constant 0 : i32
    %45 = arith.cmpi eq, %arg1, %c0_i32_22 : i32
    %46 = arith.extui %45 : i1 to i32
    %c0_i32_23 = arith.constant 0 : i32
    %47 = arith.cmpi ne, %46, %c0_i32_23 : i32
    scf.if %47 {
      %c0_24 = arith.constant 0 : index
      %c0_25 = arith.constant 0 : index
      %48 = vector.load %arg6[%c0_24, %c0_25] : memref<128x128xf32, #tpu.memory_space<vmem>>, vector<128x128xf32>
      %cst_26 = arith.constant dense<0.000000e+00> : vector<2x128xf32>
      %49 = tpu.matmul %43, %48, %cst_26 {dimension_numbers = #tpu.dot_dimension_numbers<[1], [0], [0], [1], [0, 0, 1, 1], [], []>} : vector<2x128xf32>, vector<128x128xf32>, vector<2x128xf32> -> vector<2x128xf32>
      %c0_27 = arith.constant 0 : index
      %c0_28 = arith.constant 0 : index
      %50 = vector.load %arg7[%c0_27, %c0_28] : memref<1x128xf32, #tpu.memory_space<vmem>>, vector<1x128xf32>
      %51 = vector.broadcast %50 : vector<1x128xf32> to vector<2x128xf32>
      %52 = arith.addf %49, %51 : vector<2x128xf32>
      %c0_29 = arith.constant 0 : index
      %c0_30 = arith.constant 0 : index
      %53 = vector.load %arg8[%c0_29, %c0_30] : memref<2x128xf32, #tpu.memory_space<vmem>>, vector<2x128xf32>
      tpu.vector_store %arg8[%c0_29, %c0_30], %52 {strides = array<i32>} : memref<2x128xf32, #tpu.memory_space<vmem>>, vector<2x128xf32>,
    } else {
    }
    return
  }
  func.func @transform_0(%arg0: i32, %arg1: i32) -> (i32, i32, i32, i32) {
    %c0_i32 = arith.constant 0 : i32
    %c0_i32_0 = arith.constant 0 : i32
    %c0_i32_1 = arith.constant 0 : i32
    return %arg1, %arg0, %c0_i32, %c0_i32_0 : i32, i32, i32, i32
  }
  func.func @transform_1(%arg0: i32, %arg1: i32) -> (i32, i32) {
    %c0_i32 = arith.constant 0 : i32
    %c0_i32_0 = arith.constant 0 : i32
    %c0_i32_1 = arith.constant 0 : i32
    return %c0_i32, %c0_i32_0 : i32, i32
  }
  func.func @transform_2(%arg0: i32, %arg1: i32) -> (i32, i32) {
    %c0_i32 = arith.constant 0 : i32
    %c0_i32_0 = arith.constant 0 : i32
    %c0_i32_1 = arith.constant 0 : i32
    return %c0_i32, %c0_i32_0 : i32, i32
  }
  func.func @transform_3(%arg0: i32, %arg1: i32) -> (i32, i32) {
    %c0_i32 = arith.constant 0 : i32
    %c0_i32_0 = arith.constant 0 : i32
    %c0_i32_1 = arith.constant 0 : i32
    return %c0_i32, %c0_i32_0 : i32, i32
  }
  func.func @transform_4(%arg0: i32, %arg1: i32) -> (i32, i32) {
    %c0_i32 = arith.constant 0 : i32
    %c0_i32_0 = arith.constant 0 : i32
    %c0_i32_1 = arith.constant 0 : i32
    return %c0_i32, %c0_i32_0 : i32, i32
  }
  func.func @transform_5(%arg0: i32, %arg1: i32) -> (i32, i32) {
    %c0_i32 = arith.constant 0 : i32
    %c0_i32_0 = arith.constant 0 : i32
    %c0_i32_1 = arith.constant 0 : i32
    return %c0_i32, %c0_i32_0 : i32, i32
  }
  func.func @transform_6(%arg0: i32, %arg1: i32) -> (i32, i32) {
    %c0_i32 = arith.constant 0 : i32
    %c0_i32_0 = arith.constant 0 : i32
    return %arg0, %c0_i32 : i32, i32
  }
}

</mosaic_0001>

<llo_original>
// kernel: tpu_custom_call.1
$region0: #{tpu_custom_call.1}
  #allocation0 [shape = 'u32[]', space=smem, size = 0x4, offset = 0x4, fixed_abs, tag = 'smem constant byte address 0x4 - core index']
  #allocation1 [shape = 'u32[144,128]{1,0:T(1,128)}', space=vmem, size = 0x12000, scoped, tag = 'internal scratch']
  #allocation2 [shape = 'f32[2,128]{1,0:T(2,128)}', space=vmem, size = 0x400, scoped, tag = 'scratch operand']
  %s0 = inlined_call_operand.hbm [shape: f32[1,1,16,128], index: 0, kind: input, shape index: {}]
  %s1 = inlined_call_operand.hbm [shape: f32[128,128], index: 1, kind: input, shape index: {}]
  %s2 = inlined_call_operand.hbm [shape: f32[128,128], index: 2, kind: input, shape index: {}]
  %s3 = inlined_call_operand.vmem [shape: f32[1,128], index: 3, kind: input, shape index: {}]
  %s4 = inlined_call_operand.hbm [shape: f32[128,128], index: 4, kind: input, shape index: {}]
  %s5 = inlined_call_operand.vmem [shape: f32[1,128], index: 5, kind: input, shape index: {}]
  %s6 = inlined_call_operand.hbm [shape: f32[2,128], index: 6, kind: output, shape index: {}]
  %s7 = sld [smem:[#allocation0]]
  $region58: #{tpu_custom_call.1} parent=0
    _
  %s9 = ssub.s32 1, %s7
  %s10 = scalar_select 0, %s9, %s7
  $region1: #{tpu_custom_call.1} parent=0
    #allocation3 [shape = 'u8[8192]{0}', space=vmem, size = 0x2000, scoped, tag = 'input window, operand 0, single buffered']
    #allocation4 [shape = 's32[1]{0}', space=sflag, size = 0x4, scoped, tag = 'scoped memory for tpu_custom_call.1']
    #allocation5 [shape = 's32[1]{0}', space=sflag, size = 0x4, scoped, tag = 'scoped memory for tpu_custom_call.1']
    #allocation6 [shape = 'u8[65536]{0}', space=vmem, size = 0x10000, scoped, tag = 'input window, operand 1, single buffered']
    #allocation7 [shape = 's32[1]{0}', space=sflag, size = 0x4, scoped, tag = 'scoped memory for tpu_custom_call.1']
    #allocation8 [shape = 'u8[65536]{0}', space=vmem, size = 0x10000, scoped, tag = 'input window, operand 2, single buffered']
    #allocation9 [shape = 'u8[65536]{0}', space=vmem, size = 0x10000, scoped, tag = 'input window, operand 4, single buffered']
    #allocation10 [shape = 's32[1]{0}', space=sflag, size = 0x4, scoped, tag = 'scoped memory for tpu_custom_call.1']
    #allocation11 [shape = 'u8[1024]{0}', space=vmem, size = 0x400, scoped, tag = 'output window, operand 0, single buffered']
    %11 = vsyncpa [#allocation4], 0
    %12 = vsyncpa [#allocation7], 0
    %13 = vsyncpa [#allocation10], 0
    %14 = vsyncpa [#allocation5], 0
    // Predicated region
    $region2: #{tpu_custom_call.1} parent=1 // pred_check
      _
    $region3: #{tpu_custom_call.1} parent=1 // pred_check_branch
      %16 = sbr.rel (0) target = $region5
    $region4: #{tpu_custom_call.1} parent=1 // pred_region
      %s18 = ssub.s32 256, 256
      %19 = vsyncadd [#allocation4], %s18
      %s20 = sshll.u32 [#allocation3], 4
      %s21 = int_to_ptr.vmem [resolvable:$true] %s20
      %26 = dma.hbm_to_vmem [thread:$0]  %s0, 256, %s21, [#allocation4], 128, 128, 8
    $region5: #{tpu_custom_call.1} parent=1 // pred_fallthru
      _
    // Predicated region
    $region6: #{tpu_custom_call.1} parent=1 // pred_check
      _
    $region7: #{tpu_custom_call.1} parent=1 // pred_check_branch
      %28 = sbr.rel (0) target = $region9
    $region8: #{tpu_custom_call.1} parent=1 // pred_region
      %s30 = ssub.s32 2048, 2048
      %31 = vsyncadd [#allocation7], %s30
      %s32 = sshll.u32 [#allocation6], 4
      %s33 = int_to_ptr.vmem [resolvable:$true] %s32
      %38 = dma.hbm_to_vmem [thread:$0]  %s1, 2048, %s33, [#allocation7], 128, 128, 8
    $region9: #{tpu_custom_call.1} parent=1 // pred_fallthru
      _
    // Predicated region
    $region10: #{tpu_custom_call.1} parent=1 // pred_check
      _
    $region11: #{tpu_custom_call.1} parent=1 // pred_check_branch
      %40 = sbr.rel (0) target = $region13
    $region12: #{tpu_custom_call.1} parent=1 // pred_region
      %s42 = ssub.s32 2048, 2048
      %43 = vsyncadd [#allocation7], %s42
      %s44 = sshll.u32 [#allocation8], 4
      %s45 = int_to_ptr.vmem [resolvable:$true] %s44
      %50 = dma.hbm_to_vmem [thread:$0]  %s2, 2048, %s45, [#allocation7], 128, 128, 8
    $region13: #{tpu_custom_call.1} parent=1 // pred_fallthru
      _
    // Predicated region
    $region14: #{tpu_custom_call.1} parent=1 // pred_check
      _
    $region15: #{tpu_custom_call.1} parent=1 // pred_check_branch
      %52 = sbr.rel (0) target = $region17
    $region16: #{tpu_custom_call.1} parent=1 // pred_region
      _
    $region17: #{tpu_custom_call.1} parent=1 // pred_fallthru
      _
    // Predicated region
    $region18: #{tpu_custom_call.1} parent=1 // pred_check
      _
    $region19: #{tpu_custom_call.1} parent=1 // pred_check_branch
      %54 = sbr.rel (0) target = $region21
    $region20: #{tpu_custom_call.1} parent=1 // pred_region
      %s56 = ssub.s32 2048, 2048
      %57 = vsyncadd [#allocation10], %s56
      %s58 = sshll.u32 [#allocation9], 4
      %s59 = int_to_ptr.vmem [resolvable:$true] %s58
      %64 = dma.hbm_to_vmem [thread:$0]  %s4, 2048, %s59, [#allocation10], 128, 128, 8
    $region21: #{tpu_custom_call.1} parent=1 // pred_fallthru
      _
    // Predicated region
    $region22: #{tpu_custom_call.1} parent=1 // pred_check
      _
    $region23: #{tpu_custom_call.1} parent=1 // pred_check_branch
      %66 = sbr.rel (0) target = $region25
    $region24: #{tpu_custom_call.1} parent=1 // pred_region
      _
    $region25: #{tpu_custom_call.1} parent=1 // pred_fallthru
      _
    // Predicated region
    $region26: #{tpu_custom_call.1} parent=1 // pred_check
      _
    $region27: #{tpu_custom_call.1} parent=1 // pred_check_branch
      %68 = sbr.rel (0) target = $region29
    $region28: #{tpu_custom_call.1} parent=1 // pred_region
      %69 = dma.done [#allocation4], 256
    $region29: #{tpu_custom_call.1} parent=1 // pred_fallthru
      _
    // Predicated region
    $region30: #{tpu_custom_call.1} parent=1 // pred_check
      _
    $region31: #{tpu_custom_call.1} parent=1 // pred_check_branch
      %71 = sbr.rel (0) target = $region33
    $region32: #{tpu_custom_call.1} parent=1 // pred_region
      %72 = dma.done [#allocation7], 2048
    $region33: #{tpu_custom_call.1} parent=1 // pred_fallthru
      _
    // Predicated region
    $region34: #{tpu_custom_call.1} parent=1 // pred_check
      _
    $region35: #{tpu_custom_call.1} parent=1 // pred_check_branch
      %74 = sbr.rel (0) target = $region37
    $region36: #{tpu_custom_call.1} parent=1 // pred_region
      %75 = dma.done [#allocation7], 2048
    $region37: #{tpu_custom_call.1} parent=1 // pred_fallthru
      _
    // Predicated region
    $region38: #{tpu_custom_call.1} parent=1 // pred_check
      _
    $region39: #{tpu_custom_call.1} parent=1 // pred_check_branch
      %77 = sbr.rel (0) target = $region41
    $region40: #{tpu_custom_call.1} parent=1 // pred_region
      %78 = dma.done [#allocation10], 2048
    $region41: #{tpu_custom_call.1} parent=1 // pred_fallthru
      _
    %p79 = scmp.eq.s32.totalorder 0, 0
    // Predicated region
    $region42: #{tpu_custom_call.1} parent=1 // pred_check
      %p80 = pneg %p79
    $region43: #{tpu_custom_call.1} parent=1 // pred_check_branch
      %82 = sbr.rel (%p80) target = $region45
    $region44: #{tpu_custom_call.1} parent=1 // pred_region
      %83 = vst [vmem:[#allocation2] sm:$0x3] 0.0
    $region45: #{tpu_custom_call.1} parent=1 // pred_fallthru
      _
    %v84 = vld [vmem:[#allocation3] sm:$0xff]
    %v85 = vld [vmem:[#allocation3 + $0x8] sm:$0xff]
    %v86 = vld [vmem:[#allocation6] sm:$0xff]
    %v87 = vld [vmem:[#allocation6 + $0x8] sm:$0xff]
    %v88 = vld [vmem:[#allocation6 + $0x10] sm:$0xff]
    %v89 = vld [vmem:[#allocation6 + $0x18] sm:$0xff]
    %v90 = vld [vmem:[#allocation6 + $0x20] sm:$0xff]
    %v91 = vld [vmem:[#allocation6 + $0x28] sm:$0xff]
    %v92 = vld [vmem:[#allocation6 + $0x30] sm:$0xff]
    %v93 = vld [vmem:[#allocation6 + $0x38] sm:$0xff]
    %v94 = vld [vmem:[#allocation6 + $0x40] sm:$0xff]
    %v95 = vld [vmem:[#allocation6 + $0x48] sm:$0xff]
    %v96 = vld [vmem:[#allocation6 + $0x50] sm:$0xff]
    %v97 = vld [vmem:[#allocation6 + $0x58] sm:$0xff]
    %v98 = vld [vmem:[#allocation6 + $0x60] sm:$0xff]
    %v99 = vld [vmem:[#allocation6 + $0x68] sm:$0xff]
    %v100 = vld [vmem:[#allocation6 + $0x70] sm:$0xff]
    %v101 = vld [vmem:[#allocation6 + $0x78] sm:$0xff]
    %v102 = vld [vmem:[%s3] sm:$0x1]
    %v104 = vlaneseq
    %v105 = vshrl.u32 %v104, 7
    %v106 = vsub.s32 0, %v105
    %v107 = vrot.slane %v102, %v106
    %109 = vmatprep.subr.mxu0 0.0
    %110 = vmatpush1.msra.mxu0 %v101
    %111 = vmatprep.subr.mxu0 0.0
    %112 = vmatpush1.msra.mxu0 %v100
    %113 = vmatprep.subr.mxu0 0.0
    %114 = vmatpush1.msra.mxu0 %v99
    %115 = vmatprep.subr.mxu0 0.0
    %116 = vmatpush1.msra.mxu0 %v98
    %117 = vmatprep.subr.mxu0 0.0
    %118 = vmatpush1.msra.mxu0 %v97
    %119 = vmatprep.subr.mxu0 0.0
    %120 = vmatpush1.msra.mxu0 %v96
    %121 = vmatprep.subr.mxu0 0.0
    %122 = vmatpush1.msra.mxu0 %v95
    %123 = vmatprep.subr.mxu0 0.0
    %124 = vmatpush1.msra.mxu0 %v94
    %125 = vmatprep.subr.mxu0 0.0
    %126 = vmatpush1.msra.mxu0 %v93
    %127 = vmatprep.subr.mxu0 0.0
    %128 = vmatpush1.msra.mxu0 %v92
    %129 = vmatprep.subr.mxu0 0.0
    %130 = vmatpush1.msra.mxu0 %v91
    %131 = vmatprep.subr.mxu0 0.0
    %132 = vmatpush1.msra.mxu0 %v90
    %133 = vmatprep.subr.mxu0 0.0
    %134 = vmatpush1.msra.mxu0 %v89
    %135 = vmatprep.subr.mxu0 0.0
    %136 = vmatpush1.msra.mxu0 %v88
    %137 = vmatprep.subr.mxu0 0.0
    %138 = vmatpush1.msra.mxu0 %v87
    %139 = vmatprep.subr.mxu0 0.0
    %140 = vmatpush1.msra.mxu0 %v86
    %141 = vmatprep.subr.mxu0 0.0
    %142 = vmatpush2.msra.mxu0 0.0
    %143 = vmatprep.subr.mxu0 0.0
    %144 = vmatpush2.msra.mxu0 0.0
    %145 = vmatprep.subr.mxu0 0.0
    %146 = vmatpush2.msra.mxu0 0.0
    %147 = vmatprep.subr.mxu0 0.0
    %148 = vmatpush2.msra.mxu0 0.0
    %149 = vmatprep.subr.mxu0 0.0
    %150 = vmatpush2.msra.mxu0 0.0
    %151 = vmatprep.subr.mxu0 0.0
    %152 = vmatpush2.msra.mxu0 0.0
    %153 = vmatprep.subr.mxu0 0.0
    %154 = vmatpush2.msra.mxu0 0.0
    %155 = vmatprep.subr.mxu0 0.0
    %156 = vmatpush2.msra.mxu0 0.0
    %157 = vmatprep.subr.mxu0 0.0
    %158 = vmatpush2.msra.mxu0 0.0
    %159 = vmatprep.subr.mxu0 0.0
    %160 = vmatpush2.msra.mxu0 0.0
    %161 = vmatprep.subr.mxu0 0.0
    %162 = vmatpush2.msra.mxu0 0.0
    %163 = vmatprep.subr.mxu0 0.0
    %164 = vmatpush2.msra.mxu0 0.0
    %165 = vmatprep.subr.mxu0 0.0
    %166 = vmatpush2.msra.mxu0 0.0
    %167 = vmatprep.subr.mxu0 0.0
    %168 = vmatpush2.msra.mxu0 0.0
    %169 = vmatprep.subr.mxu0 0.0
    %170 = vmatpush2.msra.mxu0 0.0
    %171 = vmatprep.subr.mxu0 0.0
    %172 = vmatpush2.msra.mxu0 0.0
    %173 = vmatprep.mubr.f32.mxu0 0.0
    %174 = vmatmul.mubr.f32.gmra.mxu0 %v84
    %v175 = vpop.f32.mrf.mxu0
    %v176 = vadd.f32 %v107, %v175
    %v177 = vpop.f32.mrf.mxu0
    %178 = vmatprep.mubr.f32.mxu0 0.0
    %179 = vmatmul.mubr.f32.gmra.mxu0 %v85
    %v180 = vpop.f32.mrf.mxu0
    %v181 = vadd.f32 %v107, %v180
    %v182 = vpop.f32.mrf.mxu0
    %183 = vdwg.mxu0
    %v184 = vld [vmem:[#allocation8] sm:$0xff]
    %v185 = vld [vmem:[#allocation8 + $0x8] sm:$0xff]
    %v186 = vld [vmem:[#allocation8 + $0x10] sm:$0xff]
    %v187 = vld [vmem:[#allocation8 + $0x18] sm:$0xff]
    %v188 = vld [vmem:[#allocation8 + $0x20] sm:$0xff]
    %v189 = vld [vmem:[#allocation8 + $0x28] sm:$0xff]
    %v190 = vld [vmem:[#allocation8 + $0x30] sm:$0xff]
    %v191 = vld [vmem:[#allocation8 + $0x38] sm:$0xff]
    %v192 = vld [vmem:[#allocation8 + $0x40] sm:$0xff]
    %v193 = vld [vmem:[#allocation8 + $0x48] sm:$0xff]
    %v194 = vld [vmem:[#allocation8 + $0x50] sm:$0xff]
    %v195 = vld [vmem:[#allocation8 + $0x58] sm:$0xff]
    %v196 = vld [vmem:[#allocation8 + $0x60] sm:$0xff]
    %v197 = vld [vmem:[#allocation8 + $0x68] sm:$0xff]
    %v198 = vld [vmem:[#allocation8 + $0x70] sm:$0xff]
    %v199 = vld [vmem:[#allocation8 + $0x78] sm:$0xff]
    %v200 = vld [vmem:[#allocation2] sm:$0x3]
    %201 = vmatprep.subr.mxu0 0.0
    %202 = vmatpush1.msra.mxu0 %v199
    %203 = vmatprep.subr.mxu0 0.0
    %204 = vmatpush1.msra.mxu0 %v198
    %205 = vmatprep.subr.mxu0 0.0
    %206 = vmatpush1.msra.mxu0 %v197
    %207 = vmatprep.subr.mxu0 0.0
    %208 = vmatpush1.msra.mxu0 %v196
    %209 = vmatprep.subr.mxu0 0.0
    %210 = vmatpush1.msra.mxu0 %v195
    %211 = vmatprep.subr.mxu0 0.0
    %212 = vmatpush1.msra.mxu0 %v194
    %213 = vmatprep.subr.mxu0 0.0
    %214 = vmatpush1.msra.mxu0 %v193
    %215 = vmatprep.subr.mxu0 0.0
    %216 = vmatpush1.msra.mxu0 %v192
    %217 = vmatprep.subr.mxu0 0.0
    %218 = vmatpush1.msra.mxu0 %v191
    %219 = vmatprep.subr.mxu0 0.0
    %220 = vmatpush1.msra.mxu0 %v190
    %221 = vmatprep.subr.mxu0 0.0
    %222 = vmatpush1.msra.mxu0 %v189
    %223 = vmatprep.subr.mxu0 0.0
    %224 = vmatpush1.msra.mxu0 %v188
    %225 = vmatprep.subr.mxu0 0.0
    %226 = vmatpush1.msra.mxu0 %v187
    %227 = vmatprep.subr.mxu0 0.0
    %228 = vmatpush1.msra.mxu0 %v186
    %229 = vmatprep.subr.mxu0 0.0
    %230 = vmatpush1.msra.mxu0 %v185
    %231 = vmatprep.subr.mxu0 0.0
    %232 = vmatpush1.msra.mxu0 %v184
    %233 = vmatprep.subr.mxu0 0.0
    %234 = vmatpush2.msra.mxu0 0.0
    %235 = vmatprep.subr.mxu0 0.0
    %236 = vmatpush2.msra.mxu0 0.0
    %237 = vmatprep.subr.mxu0 0.0
    %238 = vmatpush2.msra.mxu0 0.0
    %239 = vmatprep.subr.mxu0 0.0
    %240 = vmatpush2.msra.mxu0 0.0
    %241 = vmatprep.subr.mxu0 0.0
    %242 = vmatpush2.msra.mxu0 0.0
    %243 = vmatprep.subr.mxu0 0.0
    %244 = vmatpush2.msra.mxu0 0.0
    %245 = vmatprep.subr.mxu0 0.0
    %246 = vmatpush2.msra.mxu0 0.0
    %247 = vmatprep.subr.mxu0 0.0
    %248 = vmatpush2.msra.mxu0 0.0
    %249 = vmatprep.subr.mxu0 0.0
    %250 = vmatpush2.msra.mxu0 0.0
    %251 = vmatprep.subr.mxu0 0.0
    %252 = vmatpush2.msra.mxu0 0.0
    %253 = vmatprep.subr.mxu0 0.0
    %254 = vmatpush2.msra.mxu0 0.0
    %255 = vmatprep.subr.mxu0 0.0
    %256 = vmatpush2.msra.mxu0 0.0
    %257 = vmatprep.subr.mxu0 0.0
    %258 = vmatpush2.msra.mxu0 0.0
    %259 = vmatprep.subr.mxu0 0.0
    %260 = vmatpush2.msra.mxu0 0.0
    %261 = vmatprep.subr.mxu0 0.0
    %262 = vmatpush2.msra.mxu0 0.0
    %263 = vmatprep.subr.mxu0 0.0
    %264 = vmatpush2.msra.mxu0 0.0
    %265 = vmatprep.mubr.f32.mxu0 0.0
    %266 = vmatmul.mubr.f32.gmra.mxu0 %v200
    %v267 = vpop.f32.mrf.mxu0
    %v268 = vadd.f32 0.0, %v267
    %v269 = vpop.f32.mrf.mxu0
    %270 = vdwg.mxu0
    %v271 = vadd.f32 %v176, %v268
    %v272 = vtanh.pop %v271
    %273 = vmatprep.subr.mxu0 0.0
    %274 = vmatpush1.msra.mxu0 %v199
    %275 = vmatprep.subr.mxu0 0.0
    %276 = vmatpush1.msra.mxu0 %v198
    %277 = vmatprep.subr.mxu0 0.0
    %278 = vmatpush1.msra.mxu0 %v197
    %279 = vmatprep.subr.mxu0 0.0
    %280 = vmatpush1.msra.mxu0 %v196
    %281 = vmatprep.subr.mxu0 0.0
    %282 = vmatpush1.msra.mxu0 %v195
    %283 = vmatprep.subr.mxu0 0.0
    %284 = vmatpush1.msra.mxu0 %v194
    %285 = vmatprep.subr.mxu0 0.0
    %286 = vmatpush1.msra.mxu0 %v193
    %287 = vmatprep.subr.mxu0 0.0
    %288 = vmatpush1.msra.mxu0 %v192
    %289 = vmatprep.subr.mxu0 0.0
    %290 = vmatpush1.msra.mxu0 %v191
    %291 = vmatprep.subr.mxu0 0.0
    %292 = vmatpush1.msra.mxu0 %v190
    %293 = vmatprep.subr.mxu0 0.0
    %294 = vmatpush1.msra.mxu0 %v189
    %295 = vmatprep.subr.mxu0 0.0
    %296 = vmatpush1.msra.mxu0 %v188
    %297 = vmatprep.subr.mxu0 0.0
    %298 = vmatpush1.msra.mxu0 %v187
    %299 = vmatprep.subr.mxu0 0.0
    %300 = vmatpush1.msra.mxu0 %v186
    %301 = vmatprep.subr.mxu0 0.0
    %302 = vmatpush1.msra.mxu0 %v185
    %303 = vmatprep.subr.mxu0 0.0
    %304 = vmatpush1.msra.mxu0 %v184
    %305 = vmatprep.subr.mxu0 0.0
    %306 = vmatpush2.msra.mxu0 0.0
    %307 = vmatprep.subr.mxu0 0.0
    %308 = vmatpush2.msra.mxu0 0.0
    %309 = vmatprep.subr.mxu0 0.0
    %310 = vmatpush2.msra.mxu0 0.0
    %311 = vmatprep.subr.mxu0 0.0
    %312 = vmatpush2.msra.mxu0 0.0
    %313 = vmatprep.subr.mxu0 0.0
    %314 = vmatpush2.msra.mxu0 0.0
    %315 = vmatprep.subr.mxu0 0.0
    %316 = vmatpush2.msra.mxu0 0.0
    %317 = vmatprep.subr.mxu0 0.0
    %318 = vmatpush2.msra.mxu0 0.0
    %319 = vmatprep.subr.mxu0 0.0
    %320 = vmatpush2.msra.mxu0 0.0
    %321 = vmatprep.subr.mxu0 0.0
    %322 = vmatpush2.msra.mxu0 0.0
    %323 = vmatprep.subr.mxu0 0.0
    %324 = vmatpush2.msra.mxu0 0.0
    %325 = vmatprep.subr.mxu0 0.0
    %326 = vmatpush2.msra.mxu0 0.0
    %327 = vmatprep.subr.mxu0 0.0
    %328 = vmatpush2.msra.mxu0 0.0
    %329 = vmatprep.subr.mxu0 0.0
    %330 = vmatpush2.msra.mxu0 0.0
    %331 = vmatprep.subr.mxu0 0.0
    %332 = vmatpush2.msra.mxu0 0.0
    %333 = vmatprep.subr.mxu0 0.0
    %334 = vmatpush2.msra.mxu0 0.0
    %335 = vmatprep.subr.mxu0 0.0
    %336 = vmatpush2.msra.mxu0 0.0
    %337 = vmatprep.mubr.f32.mxu0 0.0
    %338 = vmatmul.mubr.f32.gmra.mxu0 %v272
    %v339 = vpop.f32.mrf.mxu0
    %v340 = vadd.f32 0.0, %v339
    %v341 = vpop.f32.mrf.mxu0
    %342 = vdwg.mxu0
    %v344 = vrot.slane %v340, 6
    %v346 = vadd.f32 %v176, %v344
    %v347 = vtanh.pop %v346
    %v349 = vrot.slane %v347, 2
    %351 = vmatprep.subr.mxu0 0.0
    %352 = vmatpush1.msra.mxu0 %v199
    %353 = vmatprep.subr.mxu0 0.0
    %354 = vmatpush1.msra.mxu0 %v198
    %355 = vmatprep.subr.mxu0 0.0
    %356 = vmatpush1.msra.mxu0 %v197
    %357 = vmatprep.subr.mxu0 0.0
    %358 = vmatpush1.msra.mxu0 %v196
    %359 = vmatprep.subr.mxu0 0.0
    %360 = vmatpush1.msra.mxu0 %v195
    %361 = vmatprep.subr.mxu0 0.0
    %362 = vmatpush1.msra.mxu0 %v194
    %363 = vmatprep.subr.mxu0 0.0
    %364 = vmatpush1.msra.mxu0 %v193
    %365 = vmatprep.subr.mxu0 0.0
    %366 = vmatpush1.msra.mxu0 %v192
    %367 = vmatprep.subr.mxu0 0.0
    %368 = vmatpush1.msra.mxu0 %v191
    %369 = vmatprep.subr.mxu0 0.0
    %370 = vmatpush1.msra.mxu0 %v190
    %371 = vmatprep.subr.mxu0 0.0
    %372 = vmatpush1.msra.mxu0 %v189
    %373 = vmatprep.subr.mxu0 0.0
    %374 = vmatpush1.msra.mxu0 %v188
    %375 = vmatprep.subr.mxu0 0.0
    %376 = vmatpush1.msra.mxu0 %v187
    %377 = vmatprep.subr.mxu0 0.0
    %378 = vmatpush1.msra.mxu0 %v186
    %379 = vmatprep.subr.mxu0 0.0
    %380 = vmatpush1.msra.mxu0 %v185
    %381 = vmatprep.subr.mxu0 0.0
    %382 = vmatpush1.msra.mxu0 %v184
    %383 = vmatprep.subr.mxu0 0.0
    %384 = vmatpush2.msra.mxu0 0.0
    %385 = vmatprep.subr.mxu0 0.0
    %386 = vmatpush2.msra.mxu0 0.0
    %387 = vmatprep.subr.mxu0 0.0
    %388 = vmatpush2.msra.mxu0 0.0
    %389 = vmatprep.subr.mxu0 0.0
    %390 = vmatpush2.msra.mxu0 0.0
    %391 = vmatprep.subr.mxu0 0.0
    %392 = vmatpush2.msra.mxu0 0.0
    %393 = vmatprep.subr.mxu0 0.0
    %394 = vmatpush2.msra.mxu0 0.0
    %395 = vmatprep.subr.mxu0 0.0
    %396 = vmatpush2.msra.mxu0 0.0
    %397 = vmatprep.subr.mxu0 0.0
    %398 = vmatpush2.msra.mxu0 0.0
    %399 = vmatprep.subr.mxu0 0.0
    %400 = vmatpush2.msra.mxu0 0.0
    %401 = vmatprep.subr.mxu0 0.0
    %402 = vmatpush2.msra.mxu0 0.0
    %403 = vmatprep.subr.mxu0 0.0
    %404 = vmatpush2.msra.mxu0 0.0
    %405 = vmatprep.subr.mxu0 0.0
    %406 = vmatpush2.msra.mxu0 0.0
    %407 = vmatprep.subr.mxu0 0.0
    %408 = vmatpush2.msra.mxu0 0.0
    %409 = vmatprep.subr.mxu0 0.0
    %410 = vmatpush2.msra.mxu0 0.0
    %411 = vmatprep.subr.mxu0 0.0
    %412 = vmatpush2.msra.mxu0 0.0
    %413 = vmatprep.subr.mxu0 0.0
    %414 = vmatpush2.msra.mxu0 0.0
    %415 = vmatprep.mubr.f32.mxu0 0.0
    %416 = vmatmul.mubr.f32.gmra.mxu0 %v349
    %v417 = vpop.f32.mrf.mxu0
    %v418 = vadd.f32 0.0, %v417
    %v419 = vpop.f32.mrf.mxu0
    %420 = vdwg.mxu0
    %v422 = vrot.slane %v418, 4
    %v424 = vadd.f32 %v176, %v422
    %v425 = vtanh.pop %v424
    %v427 = vrot.slane %v425, 4
    %429 = vmatprep.subr.mxu0 0.0
    %430 = vmatpush1.msra.mxu0 %v199
    %431 = vmatprep.subr.mxu0 0.0
    %432 = vmatpush1.msra.mxu0 %v198
    %433 = vmatprep.subr.mxu0 0.0
    %434 = vmatpush1.msra.mxu0 %v197
    %435 = vmatprep.subr.mxu0 0.0
    %436 = vmatpush1.msra.mxu0 %v196
    %437 = vmatprep.subr.mxu0 0.0
    %438 = vmatpush1.msra.mxu0 %v195
    %439 = vmatprep.subr.mxu0 0.0
    %440 = vmatpush1.msra.mxu0 %v194
    %441 = vmatprep.subr.mxu0 0.0
    %442 = vmatpush1.msra.mxu0 %v193
    %443 = vmatprep.subr.mxu0 0.0
    %444 = vmatpush1.msra.mxu0 %v192
    %445 = vmatprep.subr.mxu0 0.0
    %446 = vmatpush1.msra.mxu0 %v191
    %447 = vmatprep.subr.mxu0 0.0
    %448 = vmatpush1.msra.mxu0 %v190
    %449 = vmatprep.subr.mxu0 0.0
    %450 = vmatpush1.msra.mxu0 %v189
    %451 = vmatprep.subr.mxu0 0.0
    %452 = vmatpush1.msra.mxu0 %v188
    %453 = vmatprep.subr.mxu0 0.0
    %454 = vmatpush1.msra.mxu0 %v187
    %455 = vmatprep.subr.mxu0 0.0
    %456 = vmatpush1.msra.mxu0 %v186
    %457 = vmatprep.subr.mxu0 0.0
    %458 = vmatpush1.msra.mxu0 %v185
    %459 = vmatprep.subr.mxu0 0.0
    %460 = vmatpush1.msra.mxu0 %v184
    %461 = vmatprep.subr.mxu0 0.0
    %462 = vmatpush2.msra.mxu0 0.0
    %463 = vmatprep.subr.mxu0 0.0
    %464 = vmatpush2.msra.mxu0 0.0
    %465 = vmatprep.subr.mxu0 0.0
    %466 = vmatpush2.msra.mxu0 0.0
    %467 = vmatprep.subr.mxu0 0.0
    %468 = vmatpush2.msra.mxu0 0.0
    %469 = vmatprep.subr.mxu0 0.0
    %470 = vmatpush2.msra.mxu0 0.0
    %471 = vmatprep.subr.mxu0 0.0
    %472 = vmatpush2.msra.mxu0 0.0
    %473 = vmatprep.subr.mxu0 0.0
    %474 = vmatpush2.msra.mxu0 0.0
    %475 = vmatprep.subr.mxu0 0.0
    %476 = vmatpush2.msra.mxu0 0.0
    %477 = vmatprep.subr.mxu0 0.0
    %478 = vmatpush2.msra.mxu0 0.0
    %479 = vmatprep.subr.mxu0 0.0
    %480 = vmatpush2.msra.mxu0 0.0
    %481 = vmatprep.subr.mxu0 0.0
    %482 = vmatpush2.msra.mxu0 0.0
    %483 = vmatprep.subr.mxu0 0.0
    %484 = vmatpush2.msra.mxu0 0.0
    %485 = vmatprep.subr.mxu0 0.0
    %486 = vmatpush2.msra.mxu0 0.0
    %487 = vmatprep.subr.mxu0 0.0
    %488 = vmatpush2.msra.mxu0 0.0
    %489 = vmatprep.subr.mxu0 0.0
    %490 = vmatpush2.msra.mxu0 0.0
    %491 = vmatprep.subr.mxu0 0.0
    %492 = vmatpush2.msra.mxu0 0.0
    %493 = vmatprep.mubr.f32.mxu0 0.0
    %494 = vmatmul.mubr.f32.gmra.mxu0 %v427
    %v495 = vpop.f32.mrf.mxu0
    %v496 = vadd.f32 0.0, %v495
    %v497 = vpop.f32.mrf.mxu0
    %498 = vdwg.mxu0
    %v500 = vrot.slane %v496, 2
    %v502 = vadd.f32 %v176, %v500
    %v503 = vtanh.pop %v502
    %v505 = vrot.slane %v503, 6
    %507 = vmatprep.subr.mxu0 0.0
    %508 = vmatpush1.msra.mxu0 %v199
    %509 = vmatprep.subr.mxu0 0.0
    %510 = vmatpush1.msra.mxu0 %v198
    %511 = vmatprep.subr.mxu0 0.0
    %512 = vmatpush1.msra.mxu0 %v197
    %513 = vmatprep.subr.mxu0 0.0
    %514 = vmatpush1.msra.mxu0 %v196
    %515 = vmatprep.subr.mxu0 0.0
    %516 = vmatpush1.msra.mxu0 %v195
    %517 = vmatprep.subr.mxu0 0.0
    %518 = vmatpush1.msra.mxu0 %v194
    %519 = vmatprep.subr.mxu0 0.0
    %520 = vmatpush1.msra.mxu0 %v193
    %521 = vmatprep.subr.mxu0 0.0
    %522 = vmatpush1.msra.mxu0 %v192
    %523 = vmatprep.subr.mxu0 0.0
    %524 = vmatpush1.msra.mxu0 %v191
    %525 = vmatprep.subr.mxu0 0.0
    %526 = vmatpush1.msra.mxu0 %v190
    %527 = vmatprep.subr.mxu0 0.0
    %528 = vmatpush1.msra.mxu0 %v189
    %529 = vmatprep.subr.mxu0 0.0
    %530 = vmatpush1.msra.mxu0 %v188
    %531 = vmatprep.subr.mxu0 0.0
    %532 = vmatpush1.msra.mxu0 %v187
    %533 = vmatprep.subr.mxu0 0.0
    %534 = vmatpush1.msra.mxu0 %v186
    %535 = vmatprep.subr.mxu0 0.0
    %536 = vmatpush1.msra.mxu0 %v185
    %537 = vmatprep.subr.mxu0 0.0
    %538 = vmatpush1.msra.mxu0 %v184
    %539 = vmatprep.subr.mxu0 0.0
    %540 = vmatpush2.msra.mxu0 0.0
    %541 = vmatprep.subr.mxu0 0.0
    %542 = vmatpush2.msra.mxu0 0.0
    %543 = vmatprep.subr.mxu0 0.0
    %544 = vmatpush2.msra.mxu0 0.0
    %545 = vmatprep.subr.mxu0 0.0
    %546 = vmatpush2.msra.mxu0 0.0
    %547 = vmatprep.subr.mxu0 0.0
    %548 = vmatpush2.msra.mxu0 0.0
    %549 = vmatprep.subr.mxu0 0.0
    %550 = vmatpush2.msra.mxu0 0.0
    %551 = vmatprep.subr.mxu0 0.0
    %552 = vmatpush2.msra.mxu0 0.0
    %553 = vmatprep.subr.mxu0 0.0
    %554 = vmatpush2.msra.mxu0 0.0
    %555 = vmatprep.subr.mxu0 0.0
    %556 = vmatpush2.msra.mxu0 0.0
    %557 = vmatprep.subr.mxu0 0.0
    %558 = vmatpush2.msra.mxu0 0.0
    %559 = vmatprep.subr.mxu0 0.0
    %560 = vmatpush2.msra.mxu0 0.0
    %561 = vmatprep.subr.mxu0 0.0
    %562 = vmatpush2.msra.mxu0 0.0
    %563 = vmatprep.subr.mxu0 0.0
    %564 = vmatpush2.msra.mxu0 0.0
    %565 = vmatprep.subr.mxu0 0.0
    %566 = vmatpush2.msra.mxu0 0.0
    %567 = vmatprep.subr.mxu0 0.0
    %568 = vmatpush2.msra.mxu0 0.0
    %569 = vmatprep.subr.mxu0 0.0
    %570 = vmatpush2.msra.mxu0 0.0
    %571 = vmatprep.mubr.f32.mxu0 0.0
    %572 = vmatmul.mubr.f32.gmra.mxu0 %v505
    %v573 = vpop.f32.mrf.mxu0
    %v574 = vadd.f32 0.0, %v573
    %v575 = vpop.f32.mrf.mxu0
    %576 = vdwg.mxu0
    %v577 = vadd.f32 %v181, %v574
    %v578 = vtanh.pop %v577
    %579 = vmatprep.subr.mxu0 0.0
    %580 = vmatpush1.msra.mxu0 %v199
    %581 = vmatprep.subr.mxu0 0.0
    %582 = vmatpush1.msra.mxu0 %v198
    %583 = vmatprep.subr.mxu0 0.0
    %584 = vmatpush1.msra.mxu0 %v197
    %585 = vmatprep.subr.mxu0 0.0
    %586 = vmatpush1.msra.mxu0 %v196
    %587 = vmatprep.subr.mxu0 0.0
    %588 = vmatpush1.msra.mxu0 %v195
    %589 = vmatprep.subr.mxu0 0.0
    %590 = vmatpush1.msra.mxu0 %v194
    %591 = vmatprep.subr.mxu0 0.0
    %592 = vmatpush1.msra.mxu0 %v193
    %593 = vmatprep.subr.mxu0 0.0
    %594 = vmatpush1.msra.mxu0 %v192
    %595 = vmatprep.subr.mxu0 0.0
    %596 = vmatpush1.msra.mxu0 %v191
    %597 = vmatprep.subr.mxu0 0.0
    %598 = vmatpush1.msra.mxu0 %v190
    %599 = vmatprep.subr.mxu0 0.0
    %600 = vmatpush1.msra.mxu0 %v189
    %601 = vmatprep.subr.mxu0 0.0
    %602 = vmatpush1.msra.mxu0 %v188
    %603 = vmatprep.subr.mxu0 0.0
    %604 = vmatpush1.msra.mxu0 %v187
    %605 = vmatprep.subr.mxu0 0.0
    %606 = vmatpush1.msra.mxu0 %v186
    %607 = vmatprep.subr.mxu0 0.0
    %608 = vmatpush1.msra.mxu0 %v185
    %609 = vmatprep.subr.mxu0 0.0
    %610 = vmatpush1.msra.mxu0 %v184
    %611 = vmatprep.subr.mxu0 0.0
    %612 = vmatpush2.msra.mxu0 0.0
    %613 = vmatprep.subr.mxu0 0.0
    %614 = vmatpush2.msra.mxu0 0.0
    %615 = vmatprep.subr.mxu0 0.0
    %616 = vmatpush2.msra.mxu0 0.0
    %617 = vmatprep.subr.mxu0 0.0
    %618 = vmatpush2.msra.mxu0 0.0
    %619 = vmatprep.subr.mxu0 0.0
    %620 = vmatpush2.msra.mxu0 0.0
    %621 = vmatprep.subr.mxu0 0.0
    %622 = vmatpush2.msra.mxu0 0.0
    %623 = vmatprep.subr.mxu0 0.0
    %624 = vmatpush2.msra.mxu0 0.0
    %625 = vmatprep.subr.mxu0 0.0
    %626 = vmatpush2.msra.mxu0 0.0
    %627 = vmatprep.subr.mxu0 0.0
    %628 = vmatpush2.msra.mxu0 0.0
    %629 = vmatprep.subr.mxu0 0.0
    %630 = vmatpush2.msra.mxu0 0.0
    %631 = vmatprep.subr.mxu0 0.0
    %632 = vmatpush2.msra.mxu0 0.0
    %633 = vmatprep.subr.mxu0 0.0
    %634 = vmatpush2.msra.mxu0 0.0
    %635 = vmatprep.subr.mxu0 0.0
    %636 = vmatpush2.msra.mxu0 0.0
    %637 = vmatprep.subr.mxu0 0.0
    %638 = vmatpush2.msra.mxu0 0.0
    %639 = vmatprep.subr.mxu0 0.0
    %640 = vmatpush2.msra.mxu0 0.0
    %641 = vmatprep.subr.mxu0 0.0
    %642 = vmatpush2.msra.mxu0 0.0
    %643 = vmatprep.mubr.f32.mxu0 0.0
    %644 = vmatmul.mubr.f32.gmra.mxu0 %v578
    %v645 = vpop.f32.mrf.mxu0
    %v646 = vadd.f32 0.0, %v645
    %v647 = vpop.f32.mrf.mxu0
    %648 = vdwg.mxu0
    %v650 = vrot.slane %v646, 6
    %v652 = vadd.f32 %v181, %v650
    %v653 = vtanh.pop %v652
    %v655 = vrot.slane %v653, 2
    %657 = vmatprep.subr.mxu0 0.0
    %658 = vmatpush1.msra.mxu0 %v199
    %659 = vmatprep.subr.mxu0 0.0
    %660 = vmatpush1.msra.mxu0 %v198
    %661 = vmatprep.subr.mxu0 0.0
    %662 = vmatpush1.msra.mxu0 %v197
    %663 = vmatprep.subr.mxu0 0.0
    %664 = vmatpush1.msra.mxu0 %v196
    %665 = vmatprep.subr.mxu0 0.0
    %666 = vmatpush1.msra.mxu0 %v195
    %667 = vmatprep.subr.mxu0 0.0
    %668 = vmatpush1.msra.mxu0 %v194
    %669 = vmatprep.subr.mxu0 0.0
    %670 = vmatpush1.msra.mxu0 %v193
    %671 = vmatprep.subr.mxu0 0.0
    %672 = vmatpush1.msra.mxu0 %v192
    %673 = vmatprep.subr.mxu0 0.0
    %674 = vmatpush1.msra.mxu0 %v191
    %675 = vmatprep.subr.mxu0 0.0
    %676 = vmatpush1.msra.mxu0 %v190
    %677 = vmatprep.subr.mxu0 0.0
    %678 = vmatpush1.msra.mxu0 %v189
    %679 = vmatprep.subr.mxu0 0.0
    %680 = vmatpush1.msra.mxu0 %v188
    %681 = vmatprep.subr.mxu0 0.0
    %682 = vmatpush1.msra.mxu0 %v187
    %683 = vmatprep.subr.mxu0 0.0
    %684 = vmatpush1.msra.mxu0 %v186
    %685 = vmatprep.subr.mxu0 0.0
    %686 = vmatpush1.msra.mxu0 %v185
    %687 = vmatprep.subr.mxu0 0.0
    %688 = vmatpush1.msra.mxu0 %v184
    %689 = vmatprep.subr.mxu0 0.0
    %690 = vmatpush2.msra.mxu0 0.0
    %691 = vmatprep.subr.mxu0 0.0
    %692 = vmatpush2.msra.mxu0 0.0
    %693 = vmatprep.subr.mxu0 0.0
    %694 = vmatpush2.msra.mxu0 0.0
    %695 = vmatprep.subr.mxu0 0.0
    %696 = vmatpush2.msra.mxu0 0.0
    %697 = vmatprep.subr.mxu0 0.0
    %698 = vmatpush2.msra.mxu0 0.0
    %699 = vmatprep.subr.mxu0 0.0
    %700 = vmatpush2.msra.mxu0 0.0
    %701 = vmatprep.subr.mxu0 0.0
    %702 = vmatpush2.msra.mxu0 0.0
    %703 = vmatprep.subr.mxu0 0.0
    %704 = vmatpush2.msra.mxu0 0.0
    %705 = vmatprep.subr.mxu0 0.0
    %706 = vmatpush2.msra.mxu0 0.0
    %707 = vmatprep.subr.mxu0 0.0
    %708 = vmatpush2.msra.mxu0 0.0
    %709 = vmatprep.subr.mxu0 0.0
    %710 = vmatpush2.msra.mxu0 0.0
    %711 = vmatprep.subr.mxu0 0.0
    %712 = vmatpush2.msra.mxu0 0.0
    %713 = vmatprep.subr.mxu0 0.0
    %714 = vmatpush2.msra.mxu0 0.0
    %715 = vmatprep.subr.mxu0 0.0
    %716 = vmatpush2.msra.mxu0 0.0
    %717 = vmatprep.subr.mxu0 0.0
    %718 = vmatpush2.msra.mxu0 0.0
    %719 = vmatprep.subr.mxu0 0.0
    %720 = vmatpush2.msra.mxu0 0.0
    %721 = vmatprep.mubr.f32.mxu0 0.0
    %722 = vmatmul.mubr.f32.gmra.mxu0 %v655
    %v723 = vpop.f32.mrf.mxu0
    %v724 = vadd.f32 0.0, %v723
    %v725 = vpop.f32.mrf.mxu0
    %726 = vdwg.mxu0
    %v728 = vrot.slane %v724, 4
    %v730 = vadd.f32 %v181, %v728
    %v731 = vtanh.pop %v730
    %v733 = vrot.slane %v731, 4
    %735 = vmatprep.subr.mxu0 0.0
    %736 = vmatpush1.msra.mxu0 %v199
    %737 = vmatprep.subr.mxu0 0.0
    %738 = vmatpush1.msra.mxu0 %v198
    %739 = vmatprep.subr.mxu0 0.0
    %740 = vmatpush1.msra.mxu0 %v197
    %741 = vmatprep.subr.mxu0 0.0
    %742 = vmatpush1.msra.mxu0 %v196
    %743 = vmatprep.subr.mxu0 0.0
    %744 = vmatpush1.msra.mxu0 %v195
    %745 = vmatprep.subr.mxu0 0.0
    %746 = vmatpush1.msra.mxu0 %v194
    %747 = vmatprep.subr.mxu0 0.0
    %748 = vmatpush1.msra.mxu0 %v193
    %749 = vmatprep.subr.mxu0 0.0
    %750 = vmatpush1.msra.mxu0 %v192
    %751 = vmatprep.subr.mxu0 0.0
    %752 = vmatpush1.msra.mxu0 %v191
    %753 = vmatprep.subr.mxu0 0.0
    %754 = vmatpush1.msra.mxu0 %v190
    %755 = vmatprep.subr.mxu0 0.0
    %756 = vmatpush1.msra.mxu0 %v189
    %757 = vmatprep.subr.mxu0 0.0
    %758 = vmatpush1.msra.mxu0 %v188
    %759 = vmatprep.subr.mxu0 0.0
    %760 = vmatpush1.msra.mxu0 %v187
    %761 = vmatprep.subr.mxu0 0.0
    %762 = vmatpush1.msra.mxu0 %v186
    %763 = vmatprep.subr.mxu0 0.0
    %764 = vmatpush1.msra.mxu0 %v185
    %765 = vmatprep.subr.mxu0 0.0
    %766 = vmatpush1.msra.mxu0 %v184
    %767 = vmatprep.subr.mxu0 0.0
    %768 = vmatpush2.msra.mxu0 0.0
    %769 = vmatprep.subr.mxu0 0.0
    %770 = vmatpush2.msra.mxu0 0.0
    %771 = vmatprep.subr.mxu0 0.0
    %772 = vmatpush2.msra.mxu0 0.0
    %773 = vmatprep.subr.mxu0 0.0
    %774 = vmatpush2.msra.mxu0 0.0
    %775 = vmatprep.subr.mxu0 0.0
    %776 = vmatpush2.msra.mxu0 0.0
    %777 = vmatprep.subr.mxu0 0.0
    %778 = vmatpush2.msra.mxu0 0.0
    %779 = vmatprep.subr.mxu0 0.0
    %780 = vmatpush2.msra.mxu0 0.0
    %781 = vmatprep.subr.mxu0 0.0
    %782 = vmatpush2.msra.mxu0 0.0
    %783 = vmatprep.subr.mxu0 0.0
    %784 = vmatpush2.msra.mxu0 0.0
    %785 = vmatprep.subr.mxu0 0.0
    %786 = vmatpush2.msra.mxu0 0.0
    %787 = vmatprep.subr.mxu0 0.0
    %788 = vmatpush2.msra.mxu0 0.0
    %789 = vmatprep.subr.mxu0 0.0
    %790 = vmatpush2.msra.mxu0 0.0
    %791 = vmatprep.subr.mxu0 0.0
    %792 = vmatpush2.msra.mxu0 0.0
    %793 = vmatprep.subr.mxu0 0.0
    %794 = vmatpush2.msra.mxu0 0.0
    %795 = vmatprep.subr.mxu0 0.0
    %796 = vmatpush2.msra.mxu0 0.0
    %797 = vmatprep.subr.mxu0 0.0
    %798 = vmatpush2.msra.mxu0 0.0
    %799 = vmatprep.mubr.f32.mxu0 0.0
    %800 = vmatmul.mubr.f32.gmra.mxu0 %v733
    %v801 = vpop.f32.mrf.mxu0
    %v802 = vadd.f32 0.0, %v801
    %v803 = vpop.f32.mrf.mxu0
    %804 = vdwg.mxu0
    %v806 = vrot.slane %v802, 2
    %v808 = vadd.f32 %v181, %v806
    %v809 = vtanh.pop %v808
    %810 = vst [vmem:[#allocation2 - $0x6] sm:$0xc0] %v809
    // Predicated region
    $region46: #{tpu_custom_call.1} parent=1 // pred_check
      %p811 = pneg %p79
    $region47: #{tpu_custom_call.1} parent=1 // pred_check_branch
      %813 = sbr.rel (%p811) target = $region49
    $region48: #{tpu_custom_call.1} parent=1 // pred_region
      %v814 = vld [vmem:[#allocation9] sm:$0xff]
      %v815 = vld [vmem:[#allocation9 + $0x8] sm:$0xff]
      %v816 = vld [vmem:[#allocation9 + $0x10] sm:$0xff]
      %v817 = vld [vmem:[#allocation9 + $0x18] sm:$0xff]
      %v818 = vld [vmem:[#allocation9 + $0x20] sm:$0xff]
      %v819 = vld [vmem:[#allocation9 + $0x28] sm:$0xff]
      %v820 = vld [vmem:[#allocation9 + $0x30] sm:$0xff]
      %v821 = vld [vmem:[#allocation9 + $0x38] sm:$0xff]
      %v822 = vld [vmem:[#allocation9 + $0x40] sm:$0xff]
      %v823 = vld [vmem:[#allocation9 + $0x48] sm:$0xff]
      %v824 = vld [vmem:[#allocation9 + $0x50] sm:$0xff]
      %v825 = vld [vmem:[#allocation9 + $0x58] sm:$0xff]
      %v826 = vld [vmem:[#allocation9 + $0x60] sm:$0xff]
      %v827 = vld [vmem:[#allocation9 + $0x68] sm:$0xff]
      %v828 = vld [vmem:[#allocation9 + $0x70] sm:$0xff]
      %v829 = vld [vmem:[#allocation9 + $0x78] sm:$0xff]
      %v830 = vld [vmem:[%s5] sm:$0x1]
      %v832 = vlaneseq
      %v833 = vshrl.u32 %v832, 7
      %v834 = vsub.s32 0, %v833
      %v835 = vrot.slane %v830, %v834
      %v838 = vrot.slane %v809, 6
      %840 = vmatprep.subr.mxu0 0.0
      %841 = vmatpush1.msra.mxu0 %v829
      %842 = vmatprep.subr.mxu0 0.0
      %843 = vmatpush1.msra.mxu0 %v828
      %844 = vmatprep.subr.mxu0 0.0
      %845 = vmatpush1.msra.mxu0 %v827
      %846 = vmatprep.subr.mxu0 0.0
      %847 = vmatpush1.msra.mxu0 %v826
      %848 = vmatprep.subr.mxu0 0.0
      %849 = vmatpush1.msra.mxu0 %v825
      %850 = vmatprep.subr.mxu0 0.0
      %851 = vmatpush1.msra.mxu0 %v824
      %852 = vmatprep.subr.mxu0 0.0
      %853 = vmatpush1.msra.mxu0 %v823
      %854 = vmatprep.subr.mxu0 0.0
      %855 = vmatpush1.msra.mxu0 %v822
      %856 = vmatprep.subr.mxu0 0.0
      %857 = vmatpush1.msra.mxu0 %v821
      %858 = vmatprep.subr.mxu0 0.0
      %859 = vmatpush1.msra.mxu0 %v820
      %860 = vmatprep.subr.mxu0 0.0
      %861 = vmatpush1.msra.mxu0 %v819
      %862 = vmatprep.subr.mxu0 0.0
      %863 = vmatpush1.msra.mxu0 %v818
      %864 = vmatprep.subr.mxu0 0.0
      %865 = vmatpush1.msra.mxu0 %v817
      %866 = vmatprep.subr.mxu0 0.0
      %867 = vmatpush1.msra.mxu0 %v816
      %868 = vmatprep.subr.mxu0 0.0
      %869 = vmatpush1.msra.mxu0 %v815
      %870 = vmatprep.subr.mxu0 0.0
      %871 = vmatpush1.msra.mxu0 %v814
      %872 = vmatprep.subr.mxu0 0.0
      %873 = vmatpush2.msra.mxu0 0.0
      %874 = vmatprep.subr.mxu0 0.0
      %875 = vmatpush2.msra.mxu0 0.0
      %876 = vmatprep.subr.mxu0 0.0
      %877 = vmatpush2.msra.mxu0 0.0
      %878 = vmatprep.subr.mxu0 0.0
      %879 = vmatpush2.msra.mxu0 0.0
      %880 = vmatprep.subr.mxu0 0.0
      %881 = vmatpush2.msra.mxu0 0.0
      %882 = vmatprep.subr.mxu0 0.0
      %883 = vmatpush2.msra.mxu0 0.0
      %884 = vmatprep.subr.mxu0 0.0
      %885 = vmatpush2.msra.mxu0 0.0
      %886 = vmatprep.subr.mxu0 0.0
      %887 = vmatpush2.msra.mxu0 0.0
      %888 = vmatprep.subr.mxu0 0.0
      %889 = vmatpush2.msra.mxu0 0.0
      %890 = vmatprep.subr.mxu0 0.0
      %891 = vmatpush2.msra.mxu0 0.0
      %892 = vmatprep.subr.mxu0 0.0
      %893 = vmatpush2.msra.mxu0 0.0
      %894 = vmatprep.subr.mxu0 0.0
      %895 = vmatpush2.msra.mxu0 0.0
      %896 = vmatprep.subr.mxu0 0.0
      %897 = vmatpush2.msra.mxu0 0.0
      %898 = vmatprep.subr.mxu0 0.0
      %899 = vmatpush2.msra.mxu0 0.0
      %900 = vmatprep.subr.mxu0 0.0
      %901 = vmatpush2.msra.mxu0 0.0
      %902 = vmatprep.subr.mxu0 0.0
      %903 = vmatpush2.msra.mxu0 0.0
      %904 = vmatprep.mubr.f32.mxu0 0.0
      %905 = vmatmul.mubr.f32.gmra.mxu0 %v838
      %v906 = vpop.f32.mrf.mxu0
      %v907 = vadd.f32 %v835, %v906
      %v908 = vpop.f32.mrf.mxu0
      %909 = vdwg.mxu0
      %910 = vst [vmem:[#allocation11] sm:$0x3] %v907
    $region49: #{tpu_custom_call.1} parent=1 // pred_fallthru
      _
    // Predicated region
    $region50: #{tpu_custom_call.1} parent=1 // pred_check
      _
    $region51: #{tpu_custom_call.1} parent=1 // pred_check_branch
      %912 = sbr.rel (0) target = $region53
    $region52: #{tpu_custom_call.1} parent=1 // pred_region
      %s914 = ssub.s32 32, 32
      %915 = vsyncadd [#allocation5], %s914
      %s917 = sshll.u32 [#allocation11], 4
      %s918 = int_to_ptr.vmem [resolvable:$true] %s917
      %920 = dma.vmem_to_hbm [thread:$0]  %s918, 32, %s6, [#allocation5]
    $region53: #{tpu_custom_call.1} parent=1 // pred_fallthru
      _
    // Predicated region
    $region54: #{tpu_custom_call.1} parent=1 // pred_check
      _
    $region55: #{tpu_custom_call.1} parent=1 // pred_check_branch
      %922 = sbr.rel (0) target = $region57
    $region56: #{tpu_custom_call.1} parent=1 // pred_region
      %923 = dma.done [#allocation5], 32
    $region57: #{tpu_custom_call.1} parent=1 // pred_fallthru
      _
    %924 = vsyncpa [#allocation4], 1
    %925 = vsyncpa [#allocation7], 1
    %926 = vsyncpa [#allocation10], 1
    %927 = vsyncpa [#allocation5], 1

</llo_original>
